<compile_context>
chip_gen: v5e
topology: v5e:2x2
jax: 0.10.0
libtpu: 0.0.40
codegen_flags: <defaults>
</compile_context>

<pallas_src>
import jax
import jax.numpy as jnp
from jax.experimental import pallas as pl
from jax.experimental.pallas import tpu as pltpu

_INV_SQRT2 = 0.7071067811865476


def _round_up(x, m):
    return ((x + m - 1) // m) * m


def _gelu_exact(v):
    # exact (erf) GELU in f32, matching torch.nn.GELU(approximate='none')
    return 0.5 * v * (1.0 + jax.lax.erf(v * _INV_SQRT2))


def actor_kernel(x_ref,
                 wf_ref, bf_ref,    # feature_extract: Linear(S, Fp)   (bf16 W, f32 b)
                 w1_ref, b1_ref,    # fc1: Linear(Fp, Fp)
                 w2_ref, b2_ref,    # fc2: Linear(Fp, Hp)
                 w3t_ref, b3t_ref,  # fc3 transposed: (Ap, Hp) weight, (Ap, 1) bias
                 out_ref):          # transposed logits tile (Ap, tb)
    # bf16 MXU inputs, f32 accumulation; GELU/bias math in f32.
    x = x_ref[...].astype(jnp.bfloat16)

    h = jnp.dot(x, wf_ref[...], preferred_element_type=jnp.float32) + bf_ref[...]
    h = _gelu_exact(h)

    h = jnp.dot(h.astype(jnp.bfloat16), w1_ref[...],
                preferred_element_type=jnp.float32) + b1_ref[...]
    h = _gelu_exact(h)

    h = jnp.dot(h.astype(jnp.bfloat16), w2_ref[...],
                preferred_element_type=jnp.float32) + b2_ref[...]
    h = _gelu_exact(h)

    # fc3, transposed output: out_t[a, b] = sum_k w3t[a, k] * h[b, k]  (trans_b dot)
    out_t = jax.lax.dot_general(
        w3t_ref[...], h.astype(jnp.bfloat16),
        dimension_numbers=(((1,), (1,)), ((), ())),
        preferred_element_type=jnp.float32) + b3t_ref[...]
    out_ref[...] = out_t.astype(out_ref.dtype)


def prepare_params(params, lane=128):
    """One-time prep: cast weights to bf16 and zero-pad to lane-dense shapes.

    Returns a pytree reused across every forward call (no per-call weight ops).
    """
    S, F = params["wf"].shape
    H = params["w2"].shape[1]
    A = params["w3"].shape[1]
    Fp = _round_up(F, lane)
    Hp = _round_up(H, lane)
    Ap = _round_up(A, 8)          # f32 sublane multiple for the transposed output
    bf16 = jnp.bfloat16

    def pad_w(w, rows, cols):
        return jnp.zeros((rows, cols), bf16).at[:w.shape[0], :w.shape[1]].set(
            w.astype(bf16))

    def pad_b(b, cols):
        return jnp.zeros((1, cols), jnp.float32).at[:, :b.shape[1]].set(
            b.astype(jnp.float32))

    prepped = {
        "wf": pad_w(params["wf"], S, Fp),  "bf": pad_b(params["bf"], Fp),
        "w1": pad_w(params["w1"], Fp, Fp), "b1": pad_b(params["b1"], Fp),
        "w2": pad_w(params["w2"], Fp, Hp), "b2": pad_b(params["b2"], Hp),
        # fc3 stored transposed so the kernel's last matmul is trans_b (no XLU).
        "w3t": jnp.zeros((Ap, Hp), bf16).at[:A, :H].set(params["w3"].T.astype(bf16)),
        "b3t": jnp.zeros((Ap, 1), jnp.float32).at[:A, :].set(
            params["b3"].astype(jnp.float32).T),
    }
    return prepped


def curiosity_agent_forward(state, prepped, action_size, tile_b=2048):
    """state: [B, state_dim] f32; prepped: output of prepare_params()."""
    B, S = state.shape
    Fp = prepped["wf"].shape[1]
    Hp = prepped["w2"].shape[1]
    Ap = prepped["w3t"].shape[0]
    A = action_size

    # Batch tiling: big tiles (few grid steps / little padding), tb | Bp.
    num_tiles = pl.cdiv(B, tile_b)
    # v7x megacore: ensure >=2 grid steps when there is enough batch to split.
    if num_tiles == 1 and B >= 256:
        num_tiles = 2
    tb = _round_up(pl.cdiv(B, num_tiles), 8)
    Bp = tb * num_tiles
    x = state if Bp == B else jnp.pad(state, ((0, Bp - B), (0, 0)))

    def resident(shape):
        # weights/biases: same block every grid step -> stay VMEM-resident
        return pl.BlockSpec(shape, lambda i: (0, 0))

    out_t = pl.pallas_call(
        actor_kernel,
        out_shape=jax.ShapeDtypeStruct((Ap, Bp), jnp.float32),
        grid=(num_tiles,),
        in_specs=[
            pl.BlockSpec((tb, S), lambda i: (i, 0)),   # state tile
            resident((S, Fp)), resident((1, Fp)),      # feature_extract
            resident((Fp, Fp)), resident((1, Fp)),     # fc1
            resident((Fp, Hp)), resident((1, Hp)),     # fc2
            resident((Ap, Hp)), resident((Ap, 1)),     # fc3 (transposed)
        ],
        out_specs=pl.BlockSpec((Ap, tb), lambda i: (0, i)),   # transposed logits
        compiler_params=pltpu.CompilerParams(
            dimension_semantics=(pltpu.PARALLEL,)),    # shard batch across TCs
    )(x, prepped["wf"], prepped["bf"], prepped["w1"], prepped["b1"],
      prepped["w2"], prepped["b2"], prepped["w3t"], prepped["b3t"])

    # (Ap, Bp) -> (B, A); padded rows/cols are sliced away.
    return out_t[:A, :B].T


def _reference_forward(state, params):
    def gelu(v):
        return 0.5 * v * (1.0 + jax.lax.erf(v * _INV_SQRT2))
    h = gelu(state @ params["wf"] + params["bf"])
    h = gelu(h @ params["w1"] + params["b1"])
    h = gelu(h @ params["w2"] + params["b2"])
    return h @ params["w3"] + params["b3"]


def init_params(key, state_dim, feature_size, action_size):
    hidden = feature_size // action_size  # int(feature_size / action_size)
    keys = jax.random.split(key, 8)

    def lin(kw, kb, fan_in, fan_out):
        w = jax.random.normal(kw, (fan_in, fan_out), jnp.float32) * 0.1
        b = jax.random.normal(kb, (1, fan_out), jnp.float32) * 0.1
        return w, b

    wf, bf = lin(keys[0], keys[1], state_dim, feature_size)
    w1, b1 = lin(keys[2], keys[3], feature_size, feature_size)
    w2, b2 = lin(keys[4], keys[5], feature_size, hidden)
    w3, b3 = lin(keys[6], keys[7], hidden, action_size)
    return {"wf": wf, "bf": bf, "w1": w1, "b1": b1,
            "w2": w2, "b2": b2, "w3": w3, "b3": b3}


if __name__ == "__main__":
    # Small shapes consistent with the module:
    #   action_size=4, feature_size=32  ->  fc2 hidden = 32 // 4 = 8
    B, STATE_DIM, FEATURE, ACTIONS = 8, 32, 32, 4

    key = jax.random.PRNGKey(0)
    k_state, k_params, k_state2 = jax.random.split(key, 3)

    state = jax.random.normal(k_state, (B, STATE_DIM), jnp.float32)
    params = init_params(k_params, STATE_DIM, FEATURE, ACTIONS)
    prepped = prepare_params(params)   # one-time weight cast + pad

    logits = curiosity_agent_forward(state, prepped, ACTIONS)
    jax.block_until_ready(logits)

    assert logits.shape == (B, ACTIONS)
    assert logits.dtype == jnp.float32

    # loose tolerance: bf16 MXU inputs vs f32 reference
    ref = _reference_forward(state, params)
    assert jnp.allclose(logits, ref, rtol=5e-2, atol=5e-2), "mismatch vs reference"

    # Exercise the multi-tile (>=2 grid steps) path as well.
    B2 = 512
    state2 = jax.random.normal(k_state2, (B2, STATE_DIM), jnp.float32)
    logits2 = curiosity_agent_forward(state2, prepped, ACTIONS)
    jax.block_until_ready(logits2)
    assert logits2.shape == (B2, ACTIONS)
    ref2 = _reference_forward(state2, params)
    assert jnp.allclose(logits2, ref2, rtol=5e-2, atol=5e-2), "mismatch vs reference (B=512)"

    print("KERNEL_OK")
</pallas_src>

<mosaic_0001>
module attributes {stable_mosaic.version = 11 : i64} {
  func.func @actor_kernel(%arg0: i32, %arg1: memref<8x32xf32, #tpu.memory_space<vmem>>, %arg2: memref<32x128xbf16, #tpu.memory_space<vmem>>, %arg3: memref<1x128xf32, #tpu.memory_space<vmem>>, %arg4: memref<128x128xbf16, #tpu.memory_space<vmem>>, %arg5: memref<1x128xf32, #tpu.memory_space<vmem>>, %arg6: memref<128x128xbf16, #tpu.memory_space<vmem>>, %arg7: memref<1x128xf32, #tpu.memory_space<vmem>>, %arg8: memref<8x128xbf16, #tpu.memory_space<vmem>>, %arg9: memref<8x1xf32, #tpu.memory_space<vmem>>, %arg10: memref<8x8xf32, #tpu.memory_space<vmem>>) attributes {dimension_semantics = [#tpu.dimension_semantics<parallel>], iteration_bounds = array<i64: 1>, scalar_prefetch = 0 : i64, scratch_operands = 0 : i64, tpu.core_type = #tpu.core_type<tc>, window_params = [{transform_indices = @transform_0, window_bounds = array<i64: 8, 32>}, {pipeline_mode = #tpu.pipeline_mode<synchronous>, transform_indices = @transform_1, window_bounds = array<i64: 32, 128>}, {pipeline_mode = #tpu.pipeline_mode<synchronous>, transform_indices = @transform_2, window_bounds = array<i64: 1, 128>}, {pipeline_mode = #tpu.pipeline_mode<synchronous>, transform_indices = @transform_3, window_bounds = array<i64: 128, 128>}, {pipeline_mode = #tpu.pipeline_mode<synchronous>, transform_indices = @transform_4, window_bounds = array<i64: 1, 128>}, {pipeline_mode = #tpu.pipeline_mode<synchronous>, transform_indices = @transform_5, window_bounds = array<i64: 128, 128>}, {pipeline_mode = #tpu.pipeline_mode<synchronous>, transform_indices = @transform_6, window_bounds = array<i64: 1, 128>}, {pipeline_mode = #tpu.pipeline_mode<synchronous>, transform_indices = @transform_7, window_bounds = array<i64: 8, 128>}, {pipeline_mode = #tpu.pipeline_mode<synchronous>, transform_indices = @transform_8, window_bounds = array<i64: 8, 1>}, {transform_indices = @transform_9, window_bounds = array<i64: 8, 8>}]} {
    %c0 = arith.constant 0 : index
    %c0_0 = arith.constant 0 : index
    %0 = vector.load %arg1[%c0, %c0_0] : memref<8x32xf32, #tpu.memory_space<vmem>>, vector<8x32xf32>
    %1 = arith.truncf %0 : vector<8x32xf32> to vector<8x32xbf16>
    %c0_1 = arith.constant 0 : index
    %c0_2 = arith.constant 0 : index
    %2 = vector.load %arg2[%c0_1, %c0_2] : memref<32x128xbf16, #tpu.memory_space<vmem>>, vector<32x128xbf16>
    %cst = arith.constant dense<0.000000e+00> : vector<8x128xf32>
    %3 = tpu.matmul %1, %2, %cst {dimension_numbers = #tpu.dot_dimension_numbers<[1], [0], [0], [1], [0, 0, 1, 1], [], []>} : vector<8x32xbf16>, vector<32x128xbf16>, vector<8x128xf32> -> vector<8x128xf32>
    %c0_3 = arith.constant 0 : index
    %c0_4 = arith.constant 0 : index
    %4 = vector.load %arg3[%c0_3, %c0_4] : memref<1x128xf32, #tpu.memory_space<vmem>>, vector<1x128xf32>
    %5 = vector.broadcast %4 : vector<1x128xf32> to vector<8x128xf32>
    %6 = arith.addf %3, %5 : vector<8x128xf32>
    %cst_5 = arith.constant 5.000000e-01 : f32
    %7 = vector.broadcast %cst_5 : f32 to vector<8x128xf32>
    %8 = arith.mulf %7, %6 : vector<8x128xf32>
    %cst_6 = arith.constant 0.707106769 : f32
    %9 = vector.broadcast %cst_6 : f32 to vector<8x128xf32>
    %10 = arith.mulf %6, %9 : vector<8x128xf32>
    %11 = math.erf %10 : vector<8x128xf32>
    %cst_7 = arith.constant 1.000000e+00 : f32
    %12 = vector.broadcast %cst_7 : f32 to vector<8x128xf32>
    %13 = arith.addf %12, %11 : vector<8x128xf32>
    %14 = arith.mulf %8, %13 : vector<8x128xf32>
    %15 = arith.truncf %14 : vector<8x128xf32> to vector<8x128xbf16>
    %c0_8 = arith.constant 0 : index
    %c0_9 = arith.constant 0 : index
    %16 = vector.load %arg4[%c0_8, %c0_9] : memref<128x128xbf16, #tpu.memory_space<vmem>>, vector<128x128xbf16>
    %cst_10 = arith.constant dense<0.000000e+00> : vector<8x128xf32>
    %17 = tpu.matmul %15, %16, %cst_10 {dimension_numbers = #tpu.dot_dimension_numbers<[1], [0], [0], [1], [0, 0, 1, 1], [], []>} : vector<8x128xbf16>, vector<128x128xbf16>, vector<8x128xf32> -> vector<8x128xf32>
    %c0_11 = arith.constant 0 : index
    %c0_12 = arith.constant 0 : index
    %18 = vector.load %arg5[%c0_11, %c0_12] : memref<1x128xf32, #tpu.memory_space<vmem>>, vector<1x128xf32>
    %19 = vector.broadcast %18 : vector<1x128xf32> to vector<8x128xf32>
    %20 = arith.addf %17, %19 : vector<8x128xf32>
    %cst_13 = arith.constant 5.000000e-01 : f32
    %21 = vector.broadcast %cst_13 : f32 to vector<8x128xf32>
    %22 = arith.mulf %21, %20 : vector<8x128xf32>
    %cst_14 = arith.constant 0.707106769 : f32
    %23 = vector.broadcast %cst_14 : f32 to vector<8x128xf32>
    %24 = arith.mulf %20, %23 : vector<8x128xf32>
    %25 = math.erf %24 : vector<8x128xf32>
    %cst_15 = arith.constant 1.000000e+00 : f32
    %26 = vector.broadcast %cst_15 : f32 to vector<8x128xf32>
    %27 = arith.addf %26, %25 : vector<8x128xf32>
    %28 = arith.mulf %22, %27 : vector<8x128xf32>
    %29 = arith.truncf %28 : vector<8x128xf32> to vector<8x128xbf16>
    %c0_16 = arith.constant 0 : index
    %c0_17 = arith.constant 0 : index
    %30 = vector.load %arg6[%c0_16, %c0_17] : memref<128x128xbf16, #tpu.memory_space<vmem>>, vector<128x128xbf16>
    %cst_18 = arith.constant dense<0.000000e+00> : vector<8x128xf32>
    %31 = tpu.matmul %29, %30, %cst_18 {dimension_numbers = #tpu.dot_dimension_numbers<[1], [0], [0], [1], [0, 0, 1, 1], [], []>} : vector<8x128xbf16>, vector<128x128xbf16>, vector<8x128xf32> -> vector<8x128xf32>
    %c0_19 = arith.constant 0 : index
    %c0_20 = arith.constant 0 : index
    %32 = vector.load %arg7[%c0_19, %c0_20] : memref<1x128xf32, #tpu.memory_space<vmem>>, vector<1x128xf32>
    %33 = vector.broadcast %32 : vector<1x128xf32> to vector<8x128xf32>
    %34 = arith.addf %31, %33 : vector<8x128xf32>
    %cst_21 = arith.constant 5.000000e-01 : f32
    %35 = vector.broadcast %cst_21 : f32 to vector<8x128xf32>
    %36 = arith.mulf %35, %34 : vector<8x128xf32>
    %cst_22 = arith.constant 0.707106769 : f32
    %37 = vector.broadcast %cst_22 : f32 to vector<8x128xf32>
    %38 = arith.mulf %34, %37 : vector<8x128xf32>
    %39 = math.erf %38 : vector<8x128xf32>
    %cst_23 = arith.constant 1.000000e+00 : f32
    %40 = vector.broadcast %cst_23 : f32 to vector<8x128xf32>
    %41 = arith.addf %40, %39 : vector<8x128xf32>
    %42 = arith.mulf %36, %41 : vector<8x128xf32>
    %c0_24 = arith.constant 0 : index
    %c0_25 = arith.constant 0 : index
    %43 = vector.load %arg8[%c0_24, %c0_25] : memref<8x128xbf16, #tpu.memory_space<vmem>>, vector<8x128xbf16>
    %44 = arith.truncf %42 : vector<8x128xf32> to vector<8x128xbf16>
    %cst_26 = arith.constant dense<0.000000e+00> : vector<8x8xf32>
    %45 = tpu.matmul %43, %44, %cst_26 {dimension_numbers = #tpu.dot_dimension_numbers<[1], [1], [0], [0], [0, 0, 1, 0], [], []>} : vector<8x128xbf16>, vector<8x128xbf16>, vector<8x8xf32> -> vector<8x8xf32>
    %c0_27 = arith.constant 0 : index
    %c0_28 = arith.constant 0 : index
    %46 = vector.load %arg9[%c0_27, %c0_28] : memref<8x1xf32, #tpu.memory_space<vmem>>, vector<8x1xf32>
    %47 = vector.broadcast %46 : vector<8x1xf32> to vector<8x8xf32>
    %48 = arith.addf %45, %47 : vector<8x8xf32>
    %c0_29 = arith.constant 0 : index
    %c0_30 = arith.constant 0 : index
    %49 = vector.load %arg10[%c0_29, %c0_30] : memref<8x8xf32, #tpu.memory_space<vmem>>, vector<8x8xf32>
    tpu.vector_store %arg10[%c0_29, %c0_30], %48 {strides = array<i32>} : memref<8x8xf32, #tpu.memory_space<vmem>>, vector<8x8xf32>,
    return
  }
  func.func @transform_0(%arg0: i32) -> (i32, i32) {
    %c0_i32 = arith.constant 0 : i32
    %c0_i32_0 = arith.constant 0 : i32
    return %arg0, %c0_i32 : i32, i32
  }
  func.func @transform_1(%arg0: i32) -> (i32, i32) {
    %c0_i32 = arith.constant 0 : i32
    %c0_i32_0 = arith.constant 0 : i32
    %c0_i32_1 = arith.constant 0 : i32
    return %c0_i32, %c0_i32_0 : i32, i32
  }
  func.func @transform_2(%arg0: i32) -> (i32, i32) {
    %c0_i32 = arith.constant 0 : i32
    %c0_i32_0 = arith.constant 0 : i32
    %c0_i32_1 = arith.constant 0 : i32
    return %c0_i32, %c0_i32_0 : i32, i32
  }
  func.func @transform_3(%arg0: i32) -> (i32, i32) {
    %c0_i32 = arith.constant 0 : i32
    %c0_i32_0 = arith.constant 0 : i32
    %c0_i32_1 = arith.constant 0 : i32
    return %c0_i32, %c0_i32_0 : i32, i32
  }
  func.func @transform_4(%arg0: i32) -> (i32, i32) {
    %c0_i32 = arith.constant 0 : i32
    %c0_i32_0 = arith.constant 0 : i32
    %c0_i32_1 = arith.constant 0 : i32
    return %c0_i32, %c0_i32_0 : i32, i32
  }
  func.func @transform_5(%arg0: i32) -> (i32, i32) {
    %c0_i32 = arith.constant 0 : i32
    %c0_i32_0 = arith.constant 0 : i32
    %c0_i32_1 = arith.constant 0 : i32
    return %c0_i32, %c0_i32_0 : i32, i32
  }
  func.func @transform_6(%arg0: i32) -> (i32, i32) {
    %c0_i32 = arith.constant 0 : i32
    %c0_i32_0 = arith.constant 0 : i32
    %c0_i32_1 = arith.constant 0 : i32
    return %c0_i32, %c0_i32_0 : i32, i32
  }
  func.func @transform_7(%arg0: i32) -> (i32, i32) {
    %c0_i32 = arith.constant 0 : i32
    %c0_i32_0 = arith.constant 0 : i32
    %c0_i32_1 = arith.constant 0 : i32
    return %c0_i32, %c0_i32_0 : i32, i32
  }
  func.func @transform_8(%arg0: i32) -> (i32, i32) {
    %c0_i32 = arith.constant 0 : i32
    %c0_i32_0 = arith.constant 0 : i32
    %c0_i32_1 = arith.constant 0 : i32
    return %c0_i32, %c0_i32_0 : i32, i32
  }
  func.func @transform_9(%arg0: i32) -> (i32, i32) {
    %c0_i32 = arith.constant 0 : i32
    %c0_i32_0 = arith.constant 0 : i32
    return %c0_i32, %arg0 : i32, i32
  }
}

</mosaic_0001>

<llo_original>
// kernel: tpu_custom_call.1
$region0: #{tpu_custom_call.1}
  #allocation0 [shape = 'u32[]', space=smem, size = 0x4, offset = 0x4, fixed_abs, tag = 'smem constant byte address 0x4 - core index']
  #allocation1 [shape = 'u32[72,128]{1,0:T(1,128)}', space=vmem, size = 0x9000, scoped, tag = 'internal scratch']
  %s0 = inlined_call_operand.vmem [shape: f32[8,32], index: 0, kind: input, shape index: {}]
  %s1 = inlined_call_operand.hbm [shape: bf16[32,128], index: 1, kind: input, shape index: {}]
  %s2 = inlined_call_operand.vmem [shape: f32[1,128], index: 2, kind: input, shape index: {}]
  %s3 = inlined_call_operand.hbm [shape: bf16[128,128], index: 3, kind: input, shape index: {}]
  %s4 = inlined_call_operand.hbm [shape: f32[1,128], index: 4, kind: input, shape index: {}]
  %s5 = inlined_call_operand.hbm [shape: bf16[128,128], index: 5, kind: input, shape index: {}]
  %s6 = inlined_call_operand.hbm [shape: f32[1,128], index: 6, kind: input, shape index: {}]
  %s7 = inlined_call_operand.vmem [shape: bf16[8,128], index: 7, kind: input, shape index: {}]
  %s8 = inlined_call_operand.vmem [shape: f32[8,1], index: 8, kind: input, shape index: {}]
  %s9 = inlined_call_operand.hbm [shape: f32[8,8], index: 9, kind: output, shape index: {}]
  %s10 = sld [smem:[#allocation0]]
  $region66: #{tpu_custom_call.1} parent=0
    _
  %s12 = ssub.s32 1, %s10
  %s13 = scalar_select 0, %s12, %s10
  $region1: #{tpu_custom_call.1} parent=0
    #allocation2 [shape = 'u8[8192]{0}', space=vmem, size = 0x2000, scoped, tag = 'input window, operand 1, single buffered']
    #allocation3 [shape = 's32[1]{0}', space=sflag, size = 0x4, scoped, tag = 'scoped memory for tpu_custom_call.1']
    #allocation4 [shape = 's32[1]{0}', space=sflag, size = 0x4, scoped, tag = 'scoped memory for tpu_custom_call.1']
    #allocation5 [shape = 'u8[32768]{0}', space=vmem, size = 0x8000, scoped, tag = 'input window, operand 3, single buffered']
    #allocation6 [shape = 's32[1]{0}', space=sflag, size = 0x4, scoped, tag = 'scoped memory for tpu_custom_call.1']
    #allocation7 [shape = 'u8[512]{0}', space=vmem, size = 0x400, scoped, tag = 'input window, operand 4, single buffered']
    #allocation8 [shape = 'u8[32768]{0}', space=vmem, size = 0x8000, scoped, tag = 'input window, operand 5, single buffered']
    #allocation9 [shape = 's32[1]{0}', space=sflag, size = 0x4, scoped, tag = 'scoped memory for tpu_custom_call.1']
    #allocation10 [shape = 'u8[512]{0}', space=vmem, size = 0x400, scoped, tag = 'input window, operand 6, single buffered']
    #allocation11 [shape = 'u8[4096]{0}', space=vmem, size = 0x1000, scoped, tag = 'output window, operand 0, single buffered']
    %14 = vsyncpa [#allocation3], 0
    %15 = vsyncpa [#allocation6], 0
    %16 = vsyncpa [#allocation9], 0
    %17 = vsyncpa [#allocation4], 0
    // Predicated region
    $region2: #{tpu_custom_call.1} parent=1 // pred_check
      _
    $region3: #{tpu_custom_call.1} parent=1 // pred_check_branch
      %19 = sbr.rel (0) target = $region5
    $region4: #{tpu_custom_call.1} parent=1 // pred_region
      _
    $region5: #{tpu_custom_call.1} parent=1 // pred_fallthru
      _
    // Predicated region
    $region6: #{tpu_custom_call.1} parent=1 // pred_check
      _
    $region7: #{tpu_custom_call.1} parent=1 // pred_check_branch
      %21 = sbr.rel (0) target = $region9
    $region8: #{tpu_custom_call.1} parent=1 // pred_region
      %23 = vsyncadd [#allocation3], 0
      %s24 = sshll.u32 %s1, 4
      %s25 = int_to_ptr.hbm [resolvable:$true] %s24
      %s26 = sshll.u32 [#allocation2], 4
      %s27 = int_to_ptr.vmem [resolvable:$true] %s26
      %32 = dma.hbm_to_vmem [thread:$0]  %s25, 256, %s27, [#allocation3], 64, 64, 4
    $region9: #{tpu_custom_call.1} parent=1 // pred_fallthru
      _
    // Predicated region
    $region10: #{tpu_custom_call.1} parent=1 // pred_check
      _
    $region11: #{tpu_custom_call.1} parent=1 // pred_check_branch
      %34 = sbr.rel (0) target = $region13
    $region12: #{tpu_custom_call.1} parent=1 // pred_region
      _
    $region13: #{tpu_custom_call.1} parent=1 // pred_fallthru
      _
    // Predicated region
    $region14: #{tpu_custom_call.1} parent=1 // pred_check
      _
    $region15: #{tpu_custom_call.1} parent=1 // pred_check_branch
      %36 = sbr.rel (0) target = $region17
    $region16: #{tpu_custom_call.1} parent=1 // pred_region
      %38 = vsyncadd [#allocation6], 0
      %s39 = sshll.u32 %s3, 4
      %s40 = int_to_ptr.hbm [resolvable:$true] %s39
      %s41 = sshll.u32 [#allocation5], 4
      %s42 = int_to_ptr.vmem [resolvable:$true] %s41
      %47 = dma.hbm_to_vmem [thread:$0]  %s40, 1024, %s42, [#allocation6], 64, 64, 4
    $region17: #{tpu_custom_call.1} parent=1 // pred_fallthru
      _
    // Predicated region
    $region18: #{tpu_custom_call.1} parent=1 // pred_check
      _
    $region19: #{tpu_custom_call.1} parent=1 // pred_check_branch
      %49 = sbr.rel (0) target = $region21
    $region20: #{tpu_custom_call.1} parent=1 // pred_region
      %51 = vsyncadd [#allocation6], 0
      %s53 = sshll.u32 %s4, 4
      %s54 = int_to_ptr.hbm [resolvable:$true] %s53
      %s55 = sshll.u32 [#allocation7], 4
      %s56 = int_to_ptr.vmem [resolvable:$true] %s55
      %58 = dma.hbm_to_vmem [thread:$0]  %s54, 16, %s56, [#allocation6]
    $region21: #{tpu_custom_call.1} parent=1 // pred_fallthru
      _
    // Predicated region
    $region22: #{tpu_custom_call.1} parent=1 // pred_check
      _
    $region23: #{tpu_custom_call.1} parent=1 // pred_check_branch
      %60 = sbr.rel (0) target = $region25
    $region24: #{tpu_custom_call.1} parent=1 // pred_region
      %62 = vsyncadd [#allocation9], 0
      %s63 = sshll.u32 %s5, 4
      %s64 = int_to_ptr.hbm [resolvable:$true] %s63
      %s65 = sshll.u32 [#allocation8], 4
      %s66 = int_to_ptr.vmem [resolvable:$true] %s65
      %71 = dma.hbm_to_vmem [thread:$0]  %s64, 1024, %s66, [#allocation9], 64, 64, 4
    $region25: #{tpu_custom_call.1} parent=1 // pred_fallthru
      _
    // Predicated region
    $region26: #{tpu_custom_call.1} parent=1 // pred_check
      _
    $region27: #{tpu_custom_call.1} parent=1 // pred_check_branch
      %73 = sbr.rel (0) target = $region29
    $region28: #{tpu_custom_call.1} parent=1 // pred_region
      %75 = vsyncadd [#allocation9], 0
      %s77 = sshll.u32 %s6, 4
      %s78 = int_to_ptr.hbm [resolvable:$true] %s77
      %s79 = sshll.u32 [#allocation10], 4
      %s80 = int_to_ptr.vmem [resolvable:$true] %s79
      %82 = dma.hbm_to_vmem [thread:$0]  %s78, 16, %s80, [#allocation9]
    $region29: #{tpu_custom_call.1} parent=1 // pred_fallthru
      _
    // Predicated region
    $region30: #{tpu_custom_call.1} parent=1 // pred_check
      _
    $region31: #{tpu_custom_call.1} parent=1 // pred_check_branch
      %84 = sbr.rel (0) target = $region33
    $region32: #{tpu_custom_call.1} parent=1 // pred_region
      _
    $region33: #{tpu_custom_call.1} parent=1 // pred_fallthru
      _
    // Predicated region
    $region34: #{tpu_custom_call.1} parent=1 // pred_check
      _
    $region35: #{tpu_custom_call.1} parent=1 // pred_check_branch
      %86 = sbr.rel (0) target = $region37
    $region36: #{tpu_custom_call.1} parent=1 // pred_region
      _
    $region37: #{tpu_custom_call.1} parent=1 // pred_fallthru
      _
    // Predicated region
    $region38: #{tpu_custom_call.1} parent=1 // pred_check
      _
    $region39: #{tpu_custom_call.1} parent=1 // pred_check_branch
      %88 = sbr.rel (0) target = $region41
    $region40: #{tpu_custom_call.1} parent=1 // pred_region
      %90 = dma.done [#allocation3], 256
    $region41: #{tpu_custom_call.1} parent=1 // pred_fallthru
      _
    // Predicated region
    $region42: #{tpu_custom_call.1} parent=1 // pred_check
      _
    $region43: #{tpu_custom_call.1} parent=1 // pred_check_branch
      %92 = sbr.rel (0) target = $region45
    $region44: #{tpu_custom_call.1} parent=1 // pred_region
      %94 = dma.done [#allocation6], 1024
    $region45: #{tpu_custom_call.1} parent=1 // pred_fallthru
      _
    // Predicated region
    $region46: #{tpu_custom_call.1} parent=1 // pred_check
      _
    $region47: #{tpu_custom_call.1} parent=1 // pred_check_branch
      %96 = sbr.rel (0) target = $region49
    $region48: #{tpu_custom_call.1} parent=1 // pred_region
      %98 = dma.done [#allocation6], 16
    $region49: #{tpu_custom_call.1} parent=1 // pred_fallthru
      _
    // Predicated region
    $region50: #{tpu_custom_call.1} parent=1 // pred_check
      _
    $region51: #{tpu_custom_call.1} parent=1 // pred_check_branch
      %100 = sbr.rel (0) target = $region53
    $region52: #{tpu_custom_call.1} parent=1 // pred_region
      %102 = dma.done [#allocation9], 1024
    $region53: #{tpu_custom_call.1} parent=1 // pred_fallthru
      _
    // Predicated region
    $region54: #{tpu_custom_call.1} parent=1 // pred_check
      _
    $region55: #{tpu_custom_call.1} parent=1 // pred_check_branch
      %104 = sbr.rel (0) target = $region57
    $region56: #{tpu_custom_call.1} parent=1 // pred_region
      %106 = dma.done [#allocation9], 16
    $region57: #{tpu_custom_call.1} parent=1 // pred_fallthru
      _
    %v108 = vld [vmem:[%s0] sm:$0xff]
    %v109 = vpack.c.bf16 %v108, %v108
    %v110 = vld [vmem:[#allocation2] sm:$0xf]
    %v111 = vld [vmem:[#allocation2 + $0x4] sm:$0xf]
    %v112 = vld [vmem:[#allocation2 + $0x8] sm:$0xf]
    %v113 = vld [vmem:[#allocation2 + $0xc] sm:$0xf]
    %v114 = vld [vmem:[%s2] sm:$0x1]
    %v116 = vperm.slane %v114, 0
    %v122 = vunpack.c.l.b16 %v110
    %v123 = vunpack.c.l.b16 %v111
    %v124 = vunpack.c.l.b16 %v112
    %v125 = vunpack.c.l.b16 %v113
    %v126 = vpack.c.b16 %v123, %v122
    %v127 = vpack.c.b16 %v125, %v124
    %vm130 = vcmask 261120
    %v132 = vsel %vm130, %v109, 0
    %134 = vmatpush.bf16.msra.mxu0 0
    %135 = vmatpush.bf16.msra.mxu0 0
    %136 = vmatpush.bf16.msra.mxu0 0
    %137 = vmatpush.bf16.msra.mxu0 0
    %138 = vmatpush.bf16.msra.mxu0 0
    %139 = vmatpush.bf16.msra.mxu0 0
    %140 = vmatpush.bf16.msra.mxu0 %v127
    %141 = vmatpush.bf16.msra.mxu0 %v126
    %142 = vmatmul.bf16.gmra.mxu0 %v132
    %v143 = vpop.f32.mrf.mxu0
    %v144 = vadd.f32 %v116, %v143
    %v145 = vpop.f32.mrf.mxu0
    %146 = vdwg.mxu0
    %v147 = vmul.f32 %v144, 0.5
    %v148 = vmul.f32 %v144, 0.70710677
    %v149 = vmul.f32 %v148, %v148
    %v150 = vmin.f32 16.0, %v149
    %v151 = vmul.f32 %v150, 2.1237322e-06
    %v152 = vadd.f32 %v151, 0.00028619796
    %v153 = vmul.f32 %v150, %v152
    %v154 = vadd.f32 %v153, 0.0036580483
    %v155 = vmul.f32 %v150, %v154
    %v156 = vadd.f32 %v155, 0.05243302
    %v157 = vmul.f32 %v150, %v156
    %v158 = vadd.f32 %v157, 0.18741608
    %v159 = vmul.f32 %v150, %v158
    %v160 = vadd.f32 %v159, 1.1283791
    %v161 = vmul.f32 %v148, %v160
    %v162 = vmul.f32 %v150, 3.8918573e-05
    %v163 = vadd.f32 %v162, 0.001143296
    %v164 = vmul.f32 %v150, %v163
    %v165 = vadd.f32 %v164, 0.014752088
    %v166 = vmul.f32 %v150, %v165
    %v167 = vadd.f32 %v166, 0.112945676
    %v168 = vmul.f32 %v150, %v167
    %v169 = vadd.f32 %v168, 0.4994258
    %v170 = vmul.f32 %v150, %v169
    %v171 = vadd.f32 %v170, 1.0
    %v172 = vrcp.pop %v171
    %v173 = vmul.f32 %v171, %v172
    %v174 = vsub.f32 1.0, %v173
    %v175 = vmul.f32 %v172, %v174
    %v176 = vadd.f32 %v172, %v175
    %vm177 = vweird.f32 %v171
    %vm178 = vweird.f32 %v172
    %vm179 = vmor %vm177, %vm178
    %v180 = vsel %vm179, %v172, %v176
    %v181 = vand.u32 2147483647, %v171
    %vm182 = vcmp.eq.f32.partialorder %v181, 8.507059e+37
    %v183 = vand.u32 %v171, 2147483648
    %v184 = vor.u32 1.1754944e-38, %v183
    %v185 = vsel %vm182, %v184, %v180
    %v186 = vmul.f32 %v161, %v185
    %v187 = vmin.f32 %v186, 1.0
    %v188 = vmax.f32 %v187, -1.0
    %v189 = vadd.f32 %v188, 1.0
    %v190 = vmul.f32 %v147, %v189
    %v191 = vpack.c.bf16 %v190, %v190
    %v192 = vld [vmem:[#allocation5] sm:$0xf]
    %v193 = vld [vmem:[#allocation5 + $0x4] sm:$0xf]
    %v194 = vld [vmem:[#allocation5 + $0x8] sm:$0xf]
    %v195 = vld [vmem:[#allocation5 + $0xc] sm:$0xf]
    %v196 = vld [vmem:[#allocation5 + $0x10] sm:$0xf]
    %v197 = vld [vmem:[#allocation5 + $0x14] sm:$0xf]
    %v198 = vld [vmem:[#allocation5 + $0x18] sm:$0xf]
    %v199 = vld [vmem:[#allocation5 + $0x1c] sm:$0xf]
    %v200 = vld [vmem:[#allocation5 + $0x20] sm:$0xf]
    %v201 = vld [vmem:[#allocation5 + $0x24] sm:$0xf]
    %v202 = vld [vmem:[#allocation5 + $0x28] sm:$0xf]
    %v203 = vld [vmem:[#allocation5 + $0x2c] sm:$0xf]
    %v204 = vld [vmem:[#allocation5 + $0x30] sm:$0xf]
    %v205 = vld [vmem:[#allocation5 + $0x34] sm:$0xf]
    %v206 = vld [vmem:[#allocation5 + $0x38] sm:$0xf]
    %v207 = vld [vmem:[#allocation5 + $0x3c] sm:$0xf]
    %v208 = vld [vmem:[#allocation7] sm:$0x1]
    %v210 = vperm.slane %v208, 0
    %v228 = vunpack.c.l.b16 %v192
    %v229 = vunpack.c.l.b16 %v193
    %v230 = vunpack.c.l.b16 %v194
    %v231 = vunpack.c.l.b16 %v195
    %v232 = vunpack.c.l.b16 %v196
    %v233 = vunpack.c.l.b16 %v197
    %v234 = vunpack.c.l.b16 %v198
    %v235 = vunpack.c.l.b16 %v199
    %v236 = vunpack.c.l.b16 %v200
    %v237 = vunpack.c.l.b16 %v201
    %v238 = vunpack.c.l.b16 %v202
    %v239 = vunpack.c.l.b16 %v203
    %v240 = vunpack.c.l.b16 %v204
    %v241 = vunpack.c.l.b16 %v205
    %v242 = vunpack.c.l.b16 %v206
    %v243 = vunpack.c.l.b16 %v207
    %v244 = vpack.c.b16 %v229, %v228
    %v245 = vpack.c.b16 %v231, %v230
    %v246 = vpack.c.b16 %v233, %v232
    %v247 = vpack.c.b16 %v235, %v234
    %v248 = vpack.c.b16 %v237, %v236
    %v249 = vpack.c.b16 %v239, %v238
    %v250 = vpack.c.b16 %v241, %v240
    %v251 = vpack.c.b16 %v243, %v242
    %260 = vmatpush.bf16.msra.mxu0 %v251
    %261 = vmatpush.bf16.msra.mxu0 %v250
    %262 = vmatpush.bf16.msra.mxu0 %v249
    %263 = vmatpush.bf16.msra.mxu0 %v248
    %264 = vmatpush.bf16.msra.mxu0 %v247
    %265 = vmatpush.bf16.msra.mxu0 %v246
    %266 = vmatpush.bf16.msra.mxu0 %v245
    %267 = vmatpush.bf16.msra.mxu0 %v244
    %268 = vmatmul.bf16.gmra.mxu0 %v191
    %v269 = vpop.f32.mrf.mxu0
    %v270 = vadd.f32 %v210, %v269
    %v271 = vpop.f32.mrf.mxu0
    %272 = vdwg.mxu0
    %v273 = vmul.f32 %v270, 0.5
    %v274 = vmul.f32 %v270, 0.70710677
    %v275 = vmul.f32 %v274, %v274
    %v276 = vmin.f32 16.0, %v275
    %v277 = vmul.f32 %v276, 2.1237322e-06
    %v278 = vadd.f32 %v277, 0.00028619796
    %v279 = vmul.f32 %v276, %v278
    %v280 = vadd.f32 %v279, 0.0036580483
    %v281 = vmul.f32 %v276, %v280
    %v282 = vadd.f32 %v281, 0.05243302
    %v283 = vmul.f32 %v276, %v282
    %v284 = vadd.f32 %v283, 0.18741608
    %v285 = vmul.f32 %v276, %v284
    %v286 = vadd.f32 %v285, 1.1283791
    %v287 = vmul.f32 %v274, %v286
    %v288 = vmul.f32 %v276, 3.8918573e-05
    %v289 = vadd.f32 %v288, 0.001143296
    %v290 = vmul.f32 %v276, %v289
    %v291 = vadd.f32 %v290, 0.014752088
    %v292 = vmul.f32 %v276, %v291
    %v293 = vadd.f32 %v292, 0.112945676
    %v294 = vmul.f32 %v276, %v293
    %v295 = vadd.f32 %v294, 0.4994258
    %v296 = vmul.f32 %v276, %v295
    %v297 = vadd.f32 %v296, 1.0
    %v298 = vrcp.pop %v297
    %v299 = vmul.f32 %v297, %v298
    %v300 = vsub.f32 1.0, %v299
    %v301 = vmul.f32 %v298, %v300
    %v302 = vadd.f32 %v298, %v301
    %vm303 = vweird.f32 %v297
    %vm304 = vweird.f32 %v298
    %vm305 = vmor %vm303, %vm304
    %v306 = vsel %vm305, %v298, %v302
    %v307 = vand.u32 2147483647, %v297
    %vm308 = vcmp.eq.f32.partialorder %v307, 8.507059e+37
    %v309 = vand.u32 %v297, 2147483648
    %v310 = vor.u32 1.1754944e-38, %v309
    %v311 = vsel %vm308, %v310, %v306
    %v312 = vmul.f32 %v287, %v311
    %v313 = vmin.f32 %v312, 1.0
    %v314 = vmax.f32 %v313, -1.0
    %v315 = vadd.f32 %v314, 1.0
    %v316 = vmul.f32 %v273, %v315
    %v317 = vpack.c.bf16 %v316, %v316
    %v318 = vld [vmem:[#allocation8] sm:$0xf]
    %v319 = vld [vmem:[#allocation8 + $0x4] sm:$0xf]
    %v320 = vld [vmem:[#allocation8 + $0x8] sm:$0xf]
    %v321 = vld [vmem:[#allocation8 + $0xc] sm:$0xf]
    %v322 = vld [vmem:[#allocation8 + $0x10] sm:$0xf]
    %v323 = vld [vmem:[#allocation8 + $0x14] sm:$0xf]
    %v324 = vld [vmem:[#allocation8 + $0x18] sm:$0xf]
    %v325 = vld [vmem:[#allocation8 + $0x1c] sm:$0xf]
    %v326 = vld [vmem:[#allocation8 + $0x20] sm:$0xf]
    %v327 = vld [vmem:[#allocation8 + $0x24] sm:$0xf]
    %v328 = vld [vmem:[#allocation8 + $0x28] sm:$0xf]
    %v329 = vld [vmem:[#allocation8 + $0x2c] sm:$0xf]
    %v330 = vld [vmem:[#allocation8 + $0x30] sm:$0xf]
    %v331 = vld [vmem:[#allocation8 + $0x34] sm:$0xf]
    %v332 = vld [vmem:[#allocation8 + $0x38] sm:$0xf]
    %v333 = vld [vmem:[#allocation8 + $0x3c] sm:$0xf]
    %v334 = vld [vmem:[#allocation10] sm:$0x1]
    %v336 = vperm.slane %v334, 0
    %v354 = vunpack.c.l.b16 %v318
    %v355 = vunpack.c.l.b16 %v319
    %v356 = vunpack.c.l.b16 %v320
    %v357 = vunpack.c.l.b16 %v321
    %v358 = vunpack.c.l.b16 %v322
    %v359 = vunpack.c.l.b16 %v323
    %v360 = vunpack.c.l.b16 %v324
    %v361 = vunpack.c.l.b16 %v325
    %v362 = vunpack.c.l.b16 %v326
    %v363 = vunpack.c.l.b16 %v327
    %v364 = vunpack.c.l.b16 %v328
    %v365 = vunpack.c.l.b16 %v329
    %v366 = vunpack.c.l.b16 %v330
    %v367 = vunpack.c.l.b16 %v331
    %v368 = vunpack.c.l.b16 %v332
    %v369 = vunpack.c.l.b16 %v333
    %v370 = vpack.c.b16 %v355, %v354
    %v371 = vpack.c.b16 %v357, %v356
    %v372 = vpack.c.b16 %v359, %v358
    %v373 = vpack.c.b16 %v361, %v360
    %v374 = vpack.c.b16 %v363, %v362
    %v375 = vpack.c.b16 %v365, %v364
    %v376 = vpack.c.b16 %v367, %v366
    %v377 = vpack.c.b16 %v369, %v368
    %386 = vmatpush.bf16.msra.mxu0 %v377
    %387 = vmatpush.bf16.msra.mxu0 %v376
    %388 = vmatpush.bf16.msra.mxu0 %v375
    %389 = vmatpush.bf16.msra.mxu0 %v374
    %390 = vmatpush.bf16.msra.mxu0 %v373
    %391 = vmatpush.bf16.msra.mxu0 %v372
    %392 = vmatpush.bf16.msra.mxu0 %v371
    %393 = vmatpush.bf16.msra.mxu0 %v370
    %394 = vmatmul.bf16.gmra.mxu0 %v317
    %v395 = vpop.f32.mrf.mxu0
    %v396 = vadd.f32 %v336, %v395
    %v397 = vpop.f32.mrf.mxu0
    %398 = vdwg.mxu0
    %v399 = vmul.f32 %v396, 0.5
    %v400 = vmul.f32 %v396, 0.70710677
    %v401 = vmul.f32 %v400, %v400
    %v402 = vmin.f32 16.0, %v401
    %v403 = vmul.f32 %v402, 2.1237322e-06
    %v404 = vadd.f32 %v403, 0.00028619796
    %v405 = vmul.f32 %v402, %v404
    %v406 = vadd.f32 %v405, 0.0036580483
    %v407 = vmul.f32 %v402, %v406
    %v408 = vadd.f32 %v407, 0.05243302
    %v409 = vmul.f32 %v402, %v408
    %v410 = vadd.f32 %v409, 0.18741608
    %v411 = vmul.f32 %v402, %v410
    %v412 = vadd.f32 %v411, 1.1283791
    %v413 = vmul.f32 %v400, %v412
    %v414 = vmul.f32 %v402, 3.8918573e-05
    %v415 = vadd.f32 %v414, 0.001143296
    %v416 = vmul.f32 %v402, %v415
    %v417 = vadd.f32 %v416, 0.014752088
    %v418 = vmul.f32 %v402, %v417
    %v419 = vadd.f32 %v418, 0.112945676
    %v420 = vmul.f32 %v402, %v419
    %v421 = vadd.f32 %v420, 0.4994258
    %v422 = vmul.f32 %v402, %v421
    %v423 = vadd.f32 %v422, 1.0
    %v424 = vrcp.pop %v423
    %v425 = vmul.f32 %v423, %v424
    %v426 = vsub.f32 1.0, %v425
    %v427 = vmul.f32 %v424, %v426
    %v428 = vadd.f32 %v424, %v427
    %vm429 = vweird.f32 %v423
    %vm430 = vweird.f32 %v424
    %vm431 = vmor %vm429, %vm430
    %v432 = vsel %vm431, %v424, %v428
    %v433 = vand.u32 2147483647, %v423
    %vm434 = vcmp.eq.f32.partialorder %v433, 8.507059e+37
    %v435 = vand.u32 %v423, 2147483648
    %v436 = vor.u32 1.1754944e-38, %v435
    %v437 = vsel %vm434, %v436, %v432
    %v438 = vmul.f32 %v413, %v437
    %v439 = vmin.f32 %v438, 1.0
    %v440 = vmax.f32 %v439, -1.0
    %v441 = vadd.f32 %v440, 1.0
    %v442 = vmul.f32 %v399, %v441
    %v443 = vld [vmem:[%s7] sm:$0xf]
    %v444 = vpack.c.bf16 %v442, %v442
    %v445 = vld [vmem:[%s8] sm:$0xff]
    %447 = vset.pattern.permute.xlu0 0
    %448 = vperm.xlu0 %447, %v445
    %v449 = vpop.permute.xlu0 %448
    %451 = vmatpush.bf16.xpose.msra.mxu0 0
    %452 = vmatpush.bf16.xpose.msra.mxu0 0
    %453 = vmatpush.bf16.xpose.msra.mxu0 0
    %454 = vmatpush.bf16.xpose.msra.mxu0 0
    %455 = vmatpush.bf16.xpose.msra.mxu0 0
    %456 = vmatpush.bf16.xpose.msra.mxu0 0
    %457 = vmatpush.bf16.xpose.msra.mxu0 0
    %458 = vmatpush.bf16.xpose.msra.mxu0 %v444
    %459 = vmatmul.bf16.gmra.mxu0 %v443
    %v460 = vpop.f32.mrf.mxu0
    %v461 = vadd.f32 %v449, %v460
    %v462 = vpop.f32.mrf.mxu0
    %463 = vdwg.mxu0
    %vm464 = vcmask 64512
    %465 = vst.msk [vmem:[#allocation11] sm:$0xff] %vm464, %v461
    // Predicated region
    $region58: #{tpu_custom_call.1} parent=1 // pred_check
      _
    $region59: #{tpu_custom_call.1} parent=1 // pred_check_branch
      %467 = sbr.rel (0) target = $region61
    $region60: #{tpu_custom_call.1} parent=1 // pred_region
      %469 = vsyncadd [#allocation4], 0
      %s471 = sshll.u32 [#allocation11], 4
      %s472 = int_to_ptr.vmem [resolvable:$true] %s471
      %s473 = sshll.u32 %s9, 4
      %s474 = int_to_ptr.hbm [resolvable:$true] %s473
      %476 = dma.vmem_to_hbm [thread:$0]  %s472, 128, %s474, [#allocation4]
    $region61: #{tpu_custom_call.1} parent=1 // pred_fallthru
      _
    // Predicated region
    $region62: #{tpu_custom_call.1} parent=1 // pred_check
      _
    $region63: #{tpu_custom_call.1} parent=1 // pred_check_branch
      %478 = sbr.rel (0) target = $region65
    $region64: #{tpu_custom_call.1} parent=1 // pred_region
      %480 = dma.done [#allocation4], 128
    $region65: #{tpu_custom_call.1} parent=1 // pred_fallthru
      _
    %481 = vsyncpa [#allocation3], 1
    %482 = vsyncpa [#allocation6], 1
    %483 = vsyncpa [#allocation9], 1
    %484 = vsyncpa [#allocation4], 1

</llo_original>
